<compile_context>
chip_gen: v7x
topology: tpu7x:2x2x1
jax: 0.10.0
libtpu: 0.0.40
codegen_flags: <defaults>
</compile_context>

<pallas_src>
import jax
import jax.numpy as jnp
from jax import lax
from jax.experimental import pallas as pl
from jax.experimental.pallas import tpu as pltpu

# 2048 f32 rows of x = 8 MiB per buffer; double-buffered = 16 MiB.  Safe for
# v7x (32 MiB default scoped VMEM) and comfortably inside v5e/v6e limits.
_TILE_B_MAX = 2048


def _fc_eval_kernel(x_ref, w_ref, b_ref, o_ref):
    # out = x @ W^T + b.  W is kept in torch layout [N, K]; contract along K
    # so both MXU operands are lane-dense along the 1024-wide axis.
    acc = lax.dot_general(
        x_ref[...], w_ref[...],
        dimension_numbers=(((1,), (1,)), ((), ())),
        preferred_element_type=jnp.float32)
    o_ref[...] = (acc + b_ref[...]).astype(o_ref.dtype)


def _fc_train_kernel(x_ref, w_ref, b_ref, m_ref, o_ref):
    acc = lax.dot_general(
        x_ref[...], w_ref[...],
        dimension_numbers=(((1,), (1,)), ((), ())),
        preferred_element_type=jnp.float32)
    # m_ref already holds keep / (1 - p)  (inverted-dropout scale folded in).
    o_ref[...] = ((acc + b_ref[...]) * m_ref[...]).astype(o_ref.dtype)


def prepare_fc_params(weight, bias):
    """One-time parameter prep, hoisted out of the per-call path.

    weight stays in torch Linear layout [out_features=N, in_features=K]
    (lane-dense along K); bias becomes a broadcastable [1, N] row.
    """
    return weight, bias.reshape(1, -1)


def fc_forward(x, weight, bias2d, *, dropout_p=0.5, training=False, rng_key=None):
    """Pallas implementation of FC.forward.

    x:      [B, 1024] float32
    weight: [2, 1024] float32 (torch Linear layout, from prepare_fc_params)
    bias2d: [1, 2]    float32 (from prepare_fc_params)
    returns [B, 2]    float32
    """
    B, K = x.shape
    N, Kw = weight.shape
    assert Kw == K, (Kw, K)

    # Tile over batch.  If B fits in one tile, use the full extent (this also
    # sidesteps the "divisible by 8" constraint for small / odd B); otherwise
    # use the capped tile — Pallas masks the ragged last tile's writes.
    tile_b = B if B <= _TILE_B_MAX else _TILE_B_MAX
    grid = (pl.cdiv(B, tile_b),)

    x_spec = pl.BlockSpec((tile_b, K), lambda i: (i, 0))
    w_spec = pl.BlockSpec((N, K), lambda i: (0, 0))      # resident every step
    b_spec = pl.BlockSpec((1, N), lambda i: (0, 0))      # resident every step
    o_spec = pl.BlockSpec((tile_b, N), lambda i: (i, 0))

    compiler_params = pltpu.CompilerParams(
        dimension_semantics=("parallel",))

    out_shape = jax.ShapeDtypeStruct((B, N), x.dtype)

    if not training or dropout_p == 0.0:
        return pl.pallas_call(
            _fc_eval_kernel,
            out_shape=out_shape,
            grid=grid,
            in_specs=[x_spec, w_spec, b_spec],
            out_specs=o_spec,
            compiler_params=compiler_params,
        )(x, weight, bias2d)

    # Training mode: inverted dropout.  Mask is [B, N] (N=2) -> negligible
    # extra HBM traffic compared with x.
    if rng_key is None:
        rng_key = jax.random.PRNGKey(0)
    keep = jax.random.bernoulli(rng_key, p=1.0 - dropout_p, shape=(B, N))
    mask = keep.astype(x.dtype) / jnp.asarray(1.0 - dropout_p, dtype=x.dtype)
    m_spec = pl.BlockSpec((tile_b, N), lambda i: (i, 0))

    return pl.pallas_call(
        _fc_train_kernel,
        out_shape=out_shape,
        grid=grid,
        in_specs=[x_spec, w_spec, b_spec, m_spec],
        out_specs=o_spec,
        compiler_params=compiler_params,
    )(x, weight, bias2d, mask)


def init_fc_params(key, in_features=1024, out_features=2):
    """Deterministic init mirroring torch.nn.Linear defaults."""
    kw, kb = jax.random.split(key)
    bound = 1.0 / jnp.sqrt(in_features)
    weight = jax.random.uniform(
        kw, (out_features, in_features), jnp.float32, -bound, bound)
    bias = jax.random.uniform(kb, (out_features,), jnp.float32, -bound, bound)
    return weight, bias


if __name__ == "__main__":
    key = jax.random.PRNGKey(0)
    kx, kp, kd = jax.random.split(key, 3)

    B, K = 8, 1024  # Linear(1024, 2) requires feature dim 1024
    x = jax.random.normal(kx, (B, K), dtype=jnp.float32)
    weight, bias = init_fc_params(kp)
    w_prep, b_prep = prepare_fc_params(weight, bias)

    # Eval-mode forward (dropout is identity) — the hot path.
    out = jax.block_until_ready(
        fc_forward(x, w_prep, b_prep, dropout_p=0.5, training=False))

    # Reference check in plain JAX.
    ref = x @ weight.T + bias
    assert out.shape == (B, 2), out.shape
    assert jnp.allclose(out, ref, atol=1e-5, rtol=1e-5), "mismatch vs reference"

    # Exercise the training-mode (dropout) path once; check it only zeroes /
    # rescales entries of the eval output.
    p = 0.5
    out_tr = jax.block_until_ready(
        fc_forward(x, w_prep, b_prep, dropout_p=p, training=True, rng_key=kd))
    assert out_tr.shape == (B, 2)
    kept = out_tr != 0
    assert jnp.allclose(out_tr[kept], (ref / (1.0 - p))[kept], atol=1e-5, rtol=1e-5)

    print("KERNEL_OK")
</pallas_src>

<mosaic_0001>
module attributes {stable_mosaic.version = 11 : i64} {
  func.func @_fc_eval_kernel(%arg0: i32, %arg1: memref<8x1024xf32, #tpu.memory_space<vmem>>, %arg2: memref<2x1024xf32, #tpu.memory_space<vmem>>, %arg3: memref<1x2xf32, #tpu.memory_space<vmem>>, %arg4: memref<8x2xf32, #tpu.memory_space<vmem>>) attributes {dimension_semantics = [#tpu.dimension_semantics<parallel>], iteration_bounds = array<i64: 1>, scalar_prefetch = 0 : i64, scratch_operands = 0 : i64, tpu.core_type = #tpu.core_type<tc>, window_params = [{transform_indices = @transform_0, window_bounds = array<i64: 8, 1024>}, {pipeline_mode = #tpu.pipeline_mode<synchronous>, transform_indices = @transform_1, window_bounds = array<i64: 2, 1024>}, {pipeline_mode = #tpu.pipeline_mode<synchronous>, transform_indices = @transform_2, window_bounds = array<i64: 1, 2>}, {transform_indices = @transform_3, window_bounds = array<i64: 8, 2>}]} {
    %c0 = arith.constant 0 : index
    %c0_0 = arith.constant 0 : index
    %0 = vector.load %arg1[%c0, %c0_0] : memref<8x1024xf32, #tpu.memory_space<vmem>>, vector<8x1024xf32>
    %c0_1 = arith.constant 0 : index
    %c0_2 = arith.constant 0 : index
    %1 = vector.load %arg2[%c0_1, %c0_2] : memref<2x1024xf32, #tpu.memory_space<vmem>>, vector<2x1024xf32>
    %cst = arith.constant dense<0.000000e+00> : vector<8x2xf32>
    %2 = tpu.matmul %0, %1, %cst {dimension_numbers = #tpu.dot_dimension_numbers<[1], [1], [0], [0], [0, 0, 1, 0], [], []>} : vector<8x1024xf32>, vector<2x1024xf32>, vector<8x2xf32> -> vector<8x2xf32>
    %c0_3 = arith.constant 0 : index
    %c0_4 = arith.constant 0 : index
    %3 = vector.load %arg3[%c0_3, %c0_4] : memref<1x2xf32, #tpu.memory_space<vmem>>, vector<1x2xf32>
    %4 = vector.broadcast %3 : vector<1x2xf32> to vector<8x2xf32>
    %5 = arith.addf %2, %4 : vector<8x2xf32>
    %c0_5 = arith.constant 0 : index
    %c0_6 = arith.constant 0 : index
    %6 = vector.load %arg4[%c0_5, %c0_6] : memref<8x2xf32, #tpu.memory_space<vmem>>, vector<8x2xf32>
    tpu.vector_store %arg4[%c0_5, %c0_6], %5 {strides = array<i32>} : memref<8x2xf32, #tpu.memory_space<vmem>>, vector<8x2xf32>,
    return
  }
  func.func @transform_0(%arg0: i32) -> (i32, i32) {
    %c0_i32 = arith.constant 0 : i32
    %c0_i32_0 = arith.constant 0 : i32
    return %arg0, %c0_i32 : i32, i32
  }
  func.func @transform_1(%arg0: i32) -> (i32, i32) {
    %c0_i32 = arith.constant 0 : i32
    %c0_i32_0 = arith.constant 0 : i32
    %c0_i32_1 = arith.constant 0 : i32
    return %c0_i32, %c0_i32_0 : i32, i32
  }
  func.func @transform_2(%arg0: i32) -> (i32, i32) {
    %c0_i32 = arith.constant 0 : i32
    %c0_i32_0 = arith.constant 0 : i32
    %c0_i32_1 = arith.constant 0 : i32
    return %c0_i32, %c0_i32_0 : i32, i32
  }
  func.func @transform_3(%arg0: i32) -> (i32, i32) {
    %c0_i32 = arith.constant 0 : i32
    %c0_i32_0 = arith.constant 0 : i32
    return %arg0, %c0_i32 : i32, i32
  }
}

</mosaic_0001>

<llo_original>
// kernel: tpu_custom_call.1
$region0: #{tpu_custom_call.1}
  #allocation0 [shape = 'u32[]', space=smem, size = 0x4, offset = 0x4, fixed_abs, tag = 'smem constant byte address 0x4 - core index']
  #allocation1 [shape = 'u32[144,128]{1,0:T(1,128)}', space=vmem, size = 0x12000, scoped, tag = 'internal scratch']
  %s0 = inlined_call_operand.hbm [shape: f32[8,1024], index: 0, kind: input, shape index: {}]
  %s1 = inlined_call_operand.hbm [shape: f32[2,1024], index: 1, kind: input, shape index: {}]
  %s2 = inlined_call_operand.vmem [shape: f32[1,2], index: 2, kind: input, shape index: {}]
  %s3 = inlined_call_operand.vmem [shape: f32[8,2], index: 3, kind: output, shape index: {}]
  %s4 = sld [smem:[#allocation0]]
  $region30: #{tpu_custom_call.1} parent=0
    _
  %s6 = ssub.s32 1, %s4
  %s7 = scalar_select 0, %s6, %s4
  $region1: #{tpu_custom_call.1} parent=0
    #allocation2 [shape = 'u8[32768]{0}', space=vmem, size = 0x8000, scoped, tag = 'input window, operand 0, single buffered']
    #allocation3 [shape = 's32[1]{0}', space=sflag, size = 0x4, scoped, tag = 'scoped memory for tpu_custom_call.1']
    #allocation4 [shape = 'u8[8192]{0}', space=vmem, size = 0x2000, scoped, tag = 'input window, operand 1, single buffered']
    #allocation5 [shape = 's32[1]{0}', space=sflag, size = 0x4, scoped, tag = 'scoped memory for tpu_custom_call.1']
    %8 = vsyncpa [#allocation3], 0
    %9 = vsyncpa [#allocation5], 0
    // Predicated region
    $region2: #{tpu_custom_call.1} parent=1 // pred_check
      _
    $region3: #{tpu_custom_call.1} parent=1 // pred_check_branch
      %11 = sbr.rel (0) target = $region5
    $region4: #{tpu_custom_call.1} parent=1 // pred_region
      %s13 = ssub.s32 1024, 1024
      %14 = vsyncadd [#allocation3], %s13
      %s16 = sshll.u32 [#allocation2], 4
      %s17 = int_to_ptr.vmem [resolvable:$true] %s16
      %19 = dma.hbm_to_vmem [thread:$0]  %s0, 1024, %s17, [#allocation3]
    $region5: #{tpu_custom_call.1} parent=1 // pred_fallthru
      _
    // Predicated region
    $region6: #{tpu_custom_call.1} parent=1 // pred_check
      _
    $region7: #{tpu_custom_call.1} parent=1 // pred_check_branch
      %21 = sbr.rel (0) target = $region9
    $region8: #{tpu_custom_call.1} parent=1 // pred_region
      %s23 = ssub.s32 256, 256
      %24 = vsyncadd [#allocation5], %s23
      %s26 = sshll.u32 [#allocation4], 4
      %s27 = int_to_ptr.vmem [resolvable:$true] %s26
      %29 = dma.hbm_to_vmem [thread:$0]  %s1, 256, %s27, [#allocation5]
    $region9: #{tpu_custom_call.1} parent=1 // pred_fallthru
      _
    // Predicated region
    $region10: #{tpu_custom_call.1} parent=1 // pred_check
      _
    $region11: #{tpu_custom_call.1} parent=1 // pred_check_branch
      %31 = sbr.rel (0) target = $region13
    $region12: #{tpu_custom_call.1} parent=1 // pred_region
      _
    $region13: #{tpu_custom_call.1} parent=1 // pred_fallthru
      _
    // Predicated region
    $region14: #{tpu_custom_call.1} parent=1 // pred_check
      _
    $region15: #{tpu_custom_call.1} parent=1 // pred_check_branch
      %33 = sbr.rel (0) target = $region17
    $region16: #{tpu_custom_call.1} parent=1 // pred_region
      %34 = dma.done [#allocation3], 1024
    $region17: #{tpu_custom_call.1} parent=1 // pred_fallthru
      _
    // Predicated region
    $region18: #{tpu_custom_call.1} parent=1 // pred_check
      _
    $region19: #{tpu_custom_call.1} parent=1 // pred_check_branch
      %36 = sbr.rel (0) target = $region21
    $region20: #{tpu_custom_call.1} parent=1 // pred_region
      %37 = dma.done [#allocation5], 256
    $region21: #{tpu_custom_call.1} parent=1 // pred_fallthru
      _
    %v38 = vld [vmem:[#allocation2] sm:$0xff]
    %v39 = vld [vmem:[#allocation2 + $0x8] sm:$0xff]
    %v40 = vld [vmem:[#allocation2 + $0x10] sm:$0xff]
    %v41 = vld [vmem:[#allocation2 + $0x18] sm:$0xff]
    %v42 = vld [vmem:[#allocation2 + $0x20] sm:$0xff]
    %v43 = vld [vmem:[#allocation2 + $0x28] sm:$0xff]
    %v44 = vld [vmem:[#allocation2 + $0x30] sm:$0xff]
    %v45 = vld [vmem:[#allocation2 + $0x38] sm:$0xff]
    %v46 = vld [vmem:[#allocation4] sm:$0xff]
    %v47 = vld [vmem:[#allocation4 + $0x8] sm:$0xff]
    %v48 = vld [vmem:[%s2] sm:$0x1]
    %v50 = vlaneseq
    %v51 = vshrl.u32 %v50, 7
    %v52 = vsub.s32 0, %v51
    %v53 = vrot.slane %v48, %v52
    %v57 = vcombine.high %v46, %v46
    %v59 = vunpack.c.l.s4 1983009808
    %v60 = vunpack.c.0.s8 %v59
    %v61 = vlaneseq
    %v62 = vshrl.u32 %v61, 7
    %v63 = vsub.s32 %v60, %v62
    %v64 = vrot.slane %v46, %v63
    %v66 = vunpack.c.l.s4 1983009808
    %v67 = vunpack.c.0.s8 %v66
    %v68 = vlaneseq
    %v69 = vshrl.u32 %v68, 7
    %v70 = vsub.s32 %v67, %v69
    %v71 = vrot.slane %v57, %v70
    %v72 = vcombine.high %v64, %v64
    %v73 = vcombine.high %v71, %v71
    %v74 = vcombine.high %v47, %v47
    %v76 = vunpack.c.l.s4 1983009808
    %v77 = vunpack.c.0.s8 %v76
    %v78 = vlaneseq
    %v79 = vshrl.u32 %v78, 7
    %v80 = vsub.s32 %v77, %v79
    %v81 = vrot.slane %v47, %v80
    %v83 = vunpack.c.l.s4 1983009808
    %v84 = vunpack.c.0.s8 %v83
    %v85 = vlaneseq
    %v86 = vshrl.u32 %v85, 7
    %v87 = vsub.s32 %v84, %v86
    %v88 = vrot.slane %v74, %v87
    %v89 = vcombine.high %v81, %v81
    %v90 = vcombine.high %v88, %v88
    %99 = vmatprep.subr.mxu0 %v72
    %100 = vmatpush1.xpose.msra.mxu0 %v64
    %101 = vmatprep.subr.mxu0 0.0
    %102 = vmatpush1.xpose.msra.mxu0 0.0
    %103 = vmatprep.subr.mxu0 0.0
    %104 = vmatpush1.xpose.msra.mxu0 0.0
    %105 = vmatprep.subr.mxu0 0.0
    %106 = vmatpush1.xpose.msra.mxu0 0.0
    %107 = vmatprep.subr.mxu0 0.0
    %108 = vmatpush1.xpose.msra.mxu0 0.0
    %109 = vmatprep.subr.mxu0 0.0
    %110 = vmatpush1.xpose.msra.mxu0 0.0
    %111 = vmatprep.subr.mxu0 0.0
    %112 = vmatpush1.xpose.msra.mxu0 0.0
    %113 = vmatprep.subr.mxu0 0.0
    %114 = vmatpush1.xpose.msra.mxu0 0.0
    %115 = vmatprep.subr.mxu0 0.0
    %116 = vmatpush1.xpose.msra.mxu0 0.0
    %117 = vmatprep.subr.mxu0 0.0
    %118 = vmatpush1.xpose.msra.mxu0 0.0
    %119 = vmatprep.subr.mxu0 0.0
    %120 = vmatpush1.xpose.msra.mxu0 0.0
    %121 = vmatprep.subr.mxu0 0.0
    %122 = vmatpush1.xpose.msra.mxu0 0.0
    %123 = vmatprep.subr.mxu0 0.0
    %124 = vmatpush1.xpose.msra.mxu0 0.0
    %125 = vmatprep.subr.mxu0 0.0
    %126 = vmatpush1.xpose.msra.mxu0 0.0
    %127 = vmatprep.subr.mxu0 0.0
    %128 = vmatpush1.xpose.msra.mxu0 0.0
    %129 = vmatprep.subr.mxu0 0.0
    %130 = vmatpush1.xpose.msra.mxu0 0.0
    %131 = vmatprep.subr.mxu0 0.0
    %132 = vmatpush1.xpose.msra.mxu0 0.0
    %133 = vmatprep.subr.mxu0 0.0
    %134 = vmatpush1.xpose.msra.mxu0 0.0
    %135 = vmatprep.subr.mxu0 0.0
    %136 = vmatpush1.xpose.msra.mxu0 0.0
    %137 = vmatprep.subr.mxu0 0.0
    %138 = vmatpush1.xpose.msra.mxu0 0.0
    %139 = vmatprep.subr.mxu0 0.0
    %140 = vmatpush1.xpose.msra.mxu0 0.0
    %141 = vmatprep.subr.mxu0 0.0
    %142 = vmatpush1.xpose.msra.mxu0 0.0
    %143 = vmatprep.subr.mxu0 0.0
    %144 = vmatpush1.xpose.msra.mxu0 0.0
    %145 = vmatprep.subr.mxu0 0.0
    %146 = vmatpush1.xpose.msra.mxu0 0.0
    %147 = vmatprep.subr.mxu0 0.0
    %148 = vmatpush1.xpose.msra.mxu0 0.0
    %149 = vmatprep.subr.mxu0 0.0
    %150 = vmatpush1.xpose.msra.mxu0 0.0
    %151 = vmatprep.subr.mxu0 0.0
    %152 = vmatpush1.xpose.msra.mxu0 0.0
    %153 = vmatprep.subr.mxu0 0.0
    %154 = vmatpush1.xpose.msra.mxu0 0.0
    %155 = vmatprep.subr.mxu0 0.0
    %156 = vmatpush1.xpose.msra.mxu0 0.0
    %157 = vmatprep.subr.mxu0 0.0
    %158 = vmatpush1.xpose.msra.mxu0 0.0
    %159 = vmatprep.subr.mxu0 0.0
    %160 = vmatpush1.xpose.msra.mxu0 0.0
    %161 = vmatprep.subr.mxu0 0.0
    %162 = vmatpush1.xpose.msra.mxu0 0.0
    %163 = vmatprep.mubr.f32.mxu0 %v39
    %164 = vmatmul.mubr.f32.gmra.mrb[0].mxu0 %v38
    %v165 = vpop.f32.mrb[0].mxu0
    %v166 = vadd.f32 %v53, %v165
    %v167 = vpop.f32.mrb[0].mxu0
    %168 = vdwg.mxu0
    %169 = vmatprep.subr.mxu0 %v73
    %170 = vmatpush1.xpose.msra.mxu0 %v71
    %171 = vmatprep.subr.mxu0 0.0
    %172 = vmatpush1.xpose.msra.mxu0 0.0
    %173 = vmatprep.subr.mxu0 0.0
    %174 = vmatpush1.xpose.msra.mxu0 0.0
    %175 = vmatprep.subr.mxu0 0.0
    %176 = vmatpush1.xpose.msra.mxu0 0.0
    %177 = vmatprep.subr.mxu0 0.0
    %178 = vmatpush1.xpose.msra.mxu0 0.0
    %179 = vmatprep.subr.mxu0 0.0
    %180 = vmatpush1.xpose.msra.mxu0 0.0
    %181 = vmatprep.subr.mxu0 0.0
    %182 = vmatpush1.xpose.msra.mxu0 0.0
    %183 = vmatprep.subr.mxu0 0.0
    %184 = vmatpush1.xpose.msra.mxu0 0.0
    %185 = vmatprep.subr.mxu0 0.0
    %186 = vmatpush1.xpose.msra.mxu0 0.0
    %187 = vmatprep.subr.mxu0 0.0
    %188 = vmatpush1.xpose.msra.mxu0 0.0
    %189 = vmatprep.subr.mxu0 0.0
    %190 = vmatpush1.xpose.msra.mxu0 0.0
    %191 = vmatprep.subr.mxu0 0.0
    %192 = vmatpush1.xpose.msra.mxu0 0.0
    %193 = vmatprep.subr.mxu0 0.0
    %194 = vmatpush1.xpose.msra.mxu0 0.0
    %195 = vmatprep.subr.mxu0 0.0
    %196 = vmatpush1.xpose.msra.mxu0 0.0
    %197 = vmatprep.subr.mxu0 0.0
    %198 = vmatpush1.xpose.msra.mxu0 0.0
    %199 = vmatprep.subr.mxu0 0.0
    %200 = vmatpush1.xpose.msra.mxu0 0.0
    %201 = vmatprep.subr.mxu0 0.0
    %202 = vmatpush1.xpose.msra.mxu0 0.0
    %203 = vmatprep.subr.mxu0 0.0
    %204 = vmatpush1.xpose.msra.mxu0 0.0
    %205 = vmatprep.subr.mxu0 0.0
    %206 = vmatpush1.xpose.msra.mxu0 0.0
    %207 = vmatprep.subr.mxu0 0.0
    %208 = vmatpush1.xpose.msra.mxu0 0.0
    %209 = vmatprep.subr.mxu0 0.0
    %210 = vmatpush1.xpose.msra.mxu0 0.0
    %211 = vmatprep.subr.mxu0 0.0
    %212 = vmatpush1.xpose.msra.mxu0 0.0
    %213 = vmatprep.subr.mxu0 0.0
    %214 = vmatpush1.xpose.msra.mxu0 0.0
    %215 = vmatprep.subr.mxu0 0.0
    %216 = vmatpush1.xpose.msra.mxu0 0.0
    %217 = vmatprep.subr.mxu0 0.0
    %218 = vmatpush1.xpose.msra.mxu0 0.0
    %219 = vmatprep.subr.mxu0 0.0
    %220 = vmatpush1.xpose.msra.mxu0 0.0
    %221 = vmatprep.subr.mxu0 0.0
    %222 = vmatpush1.xpose.msra.mxu0 0.0
    %223 = vmatprep.subr.mxu0 0.0
    %224 = vmatpush1.xpose.msra.mxu0 0.0
    %225 = vmatprep.subr.mxu0 0.0
    %226 = vmatpush1.xpose.msra.mxu0 0.0
    %227 = vmatprep.subr.mxu0 0.0
    %228 = vmatpush1.xpose.msra.mxu0 0.0
    %229 = vmatprep.subr.mxu0 0.0
    %230 = vmatpush1.xpose.msra.mxu0 0.0
    %231 = vmatprep.subr.mxu0 0.0
    %232 = vmatpush1.xpose.msra.mxu0 0.0
    %233 = vmatprep.mubr.f32.mxu0 %v41
    %234 = vmatmul.mubr.f32.gmra.mrb[0].mxu0 %v40
    %v235 = vpop.f32.mrb[0].mxu0
    %v236 = vadd.f32 %v166, %v235
    %v237 = vpop.f32.mrb[0].mxu0
    %238 = vdwg.mxu0
    %239 = vmatprep.subr.mxu0 %v89
    %240 = vmatpush1.xpose.msra.mxu0 %v81
    %241 = vmatprep.subr.mxu0 0.0
    %242 = vmatpush1.xpose.msra.mxu0 0.0
    %243 = vmatprep.subr.mxu0 0.0
    %244 = vmatpush1.xpose.msra.mxu0 0.0
    %245 = vmatprep.subr.mxu0 0.0
    %246 = vmatpush1.xpose.msra.mxu0 0.0
    %247 = vmatprep.subr.mxu0 0.0
    %248 = vmatpush1.xpose.msra.mxu0 0.0
    %249 = vmatprep.subr.mxu0 0.0
    %250 = vmatpush1.xpose.msra.mxu0 0.0
    %251 = vmatprep.subr.mxu0 0.0
    %252 = vmatpush1.xpose.msra.mxu0 0.0
    %253 = vmatprep.subr.mxu0 0.0
    %254 = vmatpush1.xpose.msra.mxu0 0.0
    %255 = vmatprep.subr.mxu0 0.0
    %256 = vmatpush1.xpose.msra.mxu0 0.0
    %257 = vmatprep.subr.mxu0 0.0
    %258 = vmatpush1.xpose.msra.mxu0 0.0
    %259 = vmatprep.subr.mxu0 0.0
    %260 = vmatpush1.xpose.msra.mxu0 0.0
    %261 = vmatprep.subr.mxu0 0.0
    %262 = vmatpush1.xpose.msra.mxu0 0.0
    %263 = vmatprep.subr.mxu0 0.0
    %264 = vmatpush1.xpose.msra.mxu0 0.0
    %265 = vmatprep.subr.mxu0 0.0
    %266 = vmatpush1.xpose.msra.mxu0 0.0
    %267 = vmatprep.subr.mxu0 0.0
    %268 = vmatpush1.xpose.msra.mxu0 0.0
    %269 = vmatprep.subr.mxu0 0.0
    %270 = vmatpush1.xpose.msra.mxu0 0.0
    %271 = vmatprep.subr.mxu0 0.0
    %272 = vmatpush1.xpose.msra.mxu0 0.0
    %273 = vmatprep.subr.mxu0 0.0
    %274 = vmatpush1.xpose.msra.mxu0 0.0
    %275 = vmatprep.subr.mxu0 0.0
    %276 = vmatpush1.xpose.msra.mxu0 0.0
    %277 = vmatprep.subr.mxu0 0.0
    %278 = vmatpush1.xpose.msra.mxu0 0.0
    %279 = vmatprep.subr.mxu0 0.0
    %280 = vmatpush1.xpose.msra.mxu0 0.0
    %281 = vmatprep.subr.mxu0 0.0
    %282 = vmatpush1.xpose.msra.mxu0 0.0
    %283 = vmatprep.subr.mxu0 0.0
    %284 = vmatpush1.xpose.msra.mxu0 0.0
    %285 = vmatprep.subr.mxu0 0.0
    %286 = vmatpush1.xpose.msra.mxu0 0.0
    %287 = vmatprep.subr.mxu0 0.0
    %288 = vmatpush1.xpose.msra.mxu0 0.0
    %289 = vmatprep.subr.mxu0 0.0
    %290 = vmatpush1.xpose.msra.mxu0 0.0
    %291 = vmatprep.subr.mxu0 0.0
    %292 = vmatpush1.xpose.msra.mxu0 0.0
    %293 = vmatprep.subr.mxu0 0.0
    %294 = vmatpush1.xpose.msra.mxu0 0.0
    %295 = vmatprep.subr.mxu0 0.0
    %296 = vmatpush1.xpose.msra.mxu0 0.0
    %297 = vmatprep.subr.mxu0 0.0
    %298 = vmatpush1.xpose.msra.mxu0 0.0
    %299 = vmatprep.subr.mxu0 0.0
    %300 = vmatpush1.xpose.msra.mxu0 0.0
    %301 = vmatprep.subr.mxu0 0.0
    %302 = vmatpush1.xpose.msra.mxu0 0.0
    %303 = vmatprep.mubr.f32.mxu0 %v43
    %304 = vmatmul.mubr.f32.gmra.mrb[0].mxu0 %v42
    %v305 = vpop.f32.mrb[0].mxu0
    %v306 = vadd.f32 %v236, %v305
    %v307 = vpop.f32.mrb[0].mxu0
    %308 = vdwg.mxu0
    %309 = vmatprep.subr.mxu0 %v90
    %310 = vmatpush1.xpose.msra.mxu0 %v88
    %311 = vmatprep.subr.mxu0 0.0
    %312 = vmatpush1.xpose.msra.mxu0 0.0
    %313 = vmatprep.subr.mxu0 0.0
    %314 = vmatpush1.xpose.msra.mxu0 0.0
    %315 = vmatprep.subr.mxu0 0.0
    %316 = vmatpush1.xpose.msra.mxu0 0.0
    %317 = vmatprep.subr.mxu0 0.0
    %318 = vmatpush1.xpose.msra.mxu0 0.0
    %319 = vmatprep.subr.mxu0 0.0
    %320 = vmatpush1.xpose.msra.mxu0 0.0
    %321 = vmatprep.subr.mxu0 0.0
    %322 = vmatpush1.xpose.msra.mxu0 0.0
    %323 = vmatprep.subr.mxu0 0.0
    %324 = vmatpush1.xpose.msra.mxu0 0.0
    %325 = vmatprep.subr.mxu0 0.0
    %326 = vmatpush1.xpose.msra.mxu0 0.0
    %327 = vmatprep.subr.mxu0 0.0
    %328 = vmatpush1.xpose.msra.mxu0 0.0
    %329 = vmatprep.subr.mxu0 0.0
    %330 = vmatpush1.xpose.msra.mxu0 0.0
    %331 = vmatprep.subr.mxu0 0.0
    %332 = vmatpush1.xpose.msra.mxu0 0.0
    %333 = vmatprep.subr.mxu0 0.0
    %334 = vmatpush1.xpose.msra.mxu0 0.0
    %335 = vmatprep.subr.mxu0 0.0
    %336 = vmatpush1.xpose.msra.mxu0 0.0
    %337 = vmatprep.subr.mxu0 0.0
    %338 = vmatpush1.xpose.msra.mxu0 0.0
    %339 = vmatprep.subr.mxu0 0.0
    %340 = vmatpush1.xpose.msra.mxu0 0.0
    %341 = vmatprep.subr.mxu0 0.0
    %342 = vmatpush1.xpose.msra.mxu0 0.0
    %343 = vmatprep.subr.mxu0 0.0
    %344 = vmatpush1.xpose.msra.mxu0 0.0
    %345 = vmatprep.subr.mxu0 0.0
    %346 = vmatpush1.xpose.msra.mxu0 0.0
    %347 = vmatprep.subr.mxu0 0.0
    %348 = vmatpush1.xpose.msra.mxu0 0.0
    %349 = vmatprep.subr.mxu0 0.0
    %350 = vmatpush1.xpose.msra.mxu0 0.0
    %351 = vmatprep.subr.mxu0 0.0
    %352 = vmatpush1.xpose.msra.mxu0 0.0
    %353 = vmatprep.subr.mxu0 0.0
    %354 = vmatpush1.xpose.msra.mxu0 0.0
    %355 = vmatprep.subr.mxu0 0.0
    %356 = vmatpush1.xpose.msra.mxu0 0.0
    %357 = vmatprep.subr.mxu0 0.0
    %358 = vmatpush1.xpose.msra.mxu0 0.0
    %359 = vmatprep.subr.mxu0 0.0
    %360 = vmatpush1.xpose.msra.mxu0 0.0
    %361 = vmatprep.subr.mxu0 0.0
    %362 = vmatpush1.xpose.msra.mxu0 0.0
    %363 = vmatprep.subr.mxu0 0.0
    %364 = vmatpush1.xpose.msra.mxu0 0.0
    %365 = vmatprep.subr.mxu0 0.0
    %366 = vmatpush1.xpose.msra.mxu0 0.0
    %367 = vmatprep.subr.mxu0 0.0
    %368 = vmatpush1.xpose.msra.mxu0 0.0
    %369 = vmatprep.subr.mxu0 0.0
    %370 = vmatpush1.xpose.msra.mxu0 0.0
    %371 = vmatprep.subr.mxu0 0.0
    %372 = vmatpush1.xpose.msra.mxu0 0.0
    %373 = vmatprep.mubr.f32.mxu0 %v45
    %374 = vmatmul.mubr.f32.gmra.mrb[0].mxu0 %v44
    %v375 = vpop.f32.mrb[0].mxu0
    %v376 = vadd.f32 %v306, %v375
    %v377 = vpop.f32.mrb[0].mxu0
    %378 = vdwg.mxu0
    %vm379 = vcmask 15360
    %380 = vst.msk [vmem:[%s3] sm:$0xff] %vm379, %v376
    // Predicated region
    $region22: #{tpu_custom_call.1} parent=1 // pred_check
      _
    $region23: #{tpu_custom_call.1} parent=1 // pred_check_branch
      %382 = sbr.rel (0) target = $region25
    $region24: #{tpu_custom_call.1} parent=1 // pred_region
      _
    $region25: #{tpu_custom_call.1} parent=1 // pred_fallthru
      _
    // Predicated region
    $region26: #{tpu_custom_call.1} parent=1 // pred_check
      _
    $region27: #{tpu_custom_call.1} parent=1 // pred_check_branch
      %384 = sbr.rel (0) target = $region29
    $region28: #{tpu_custom_call.1} parent=1 // pred_region
      _
    $region29: #{tpu_custom_call.1} parent=1 // pred_fallthru
      _
    %385 = vsyncpa [#allocation3], 1
    %386 = vsyncpa [#allocation5], 1

</llo_original>
